<compile_context>
chip_gen: v6e
topology: v6e:2x2x1
jax: 0.10.0
libtpu: 0.0.40
codegen_flags: <defaults>
</compile_context>

<pallas_src>
import functools

import jax
import jax.numpy as jnp
from jax.experimental import pallas as pl
from jax.experimental.pallas import tpu as pltpu

_EPS = 1e-5
_NEG_SLOPE = 0.2  # LeakyReLU negative slope


def _round_up(n, m):
    return (n + m - 1) // m * m


# --------------------------------------------------------------------------- #
# kernels (features on sublanes, batch on lanes everywhere)
# --------------------------------------------------------------------------- #
def _write_bn_partials(h, ps_ref):
    """Per-tile [sum | sum-of-squares] along the lane (batch) axis -> (4, 2)."""
    ps_ref[:, 0:1] = jnp.sum(h, axis=1, keepdims=True)      # XLU cross-lane reduce
    ps_ref[:, 1:2] = jnp.sum(h * h, axis=1, keepdims=True)


def _stage1_kernel(x_ref, w1t_ref, h1_ref, ps_ref):
    # h1^T = W1^T @ x^T, written as dot_general contracting the *last* dim of both
    # operands (A @ B^T form) so the MXU consumes x without any relayout.
    # Linear bias b1 omitted: a per-feature additive bias is exactly cancelled by
    # the following (training-mode) BatchNorm mean subtraction.
    h = jax.lax.dot_general(
        w1t_ref[...], x_ref[...],
        dimension_numbers=(((1,), (1,)), ((), ())),
        preferred_element_type=jnp.float32)                  # (4, tile_b)
    h1_ref[...] = h
    # No stats mask needed: padded x rows are zero AND b1 is omitted, so padded
    # columns of h are exactly zero and contribute nothing to sum / sumsq.
    _write_bn_partials(h, ps_ref)


def _stage2_kernel(h1_ref, sc1_ref, w2t_ref, h2_ref, ps_ref, *, tile_b, batch,
                   needs_mask):
    # Folded BatchNorm1d (one FMA, (4,1) broadcast over lanes) + LeakyReLU(0.2).
    a = h1_ref[...] * sc1_ref[:, 0:1] + sc1_ref[:, 1:2]
    a = jnp.where(a > 0, a, _NEG_SLOPE * a)
    # h2^T = W2^T @ a^T; both operands already transposed -> plain dot, no relayout.
    # Linear bias b2 omitted (cancelled by the next BatchNorm mean subtraction).
    h = jnp.dot(w2t_ref[...], a, preferred_element_type=jnp.float32)
    h2_ref[...] = h
    if needs_mask:  # static Python bool: only emitted when the batch was padded
        col = pl.program_id(0) * tile_b + jax.lax.broadcasted_iota(
            jnp.int32, h.shape, 1)
        h = jnp.where(col < batch, h, 0.0)
    _write_bn_partials(h, ps_ref)


def _stage3_kernel(h2_ref, sc2_ref, w3t_ref, b3_ref, out_ref):
    a = h2_ref[...] * sc2_ref[:, 0:1] + sc2_ref[:, 1:2]
    a = jnp.where(a > 0, a, _NEG_SLOPE * a)
    # z^T = W3^T @ a^T -> (out_dim, tile_b): batch stays on the lane axis, so the
    # final store is lane-dense (no 1-lane masked column store for out_dim == 1).
    zt = jnp.dot(w3t_ref[...], a, preferred_element_type=jnp.float32)
    zt = zt + b3_ref[...]                                    # (out_dim, 1) lane bcast
    # Numerically stable sigmoid via exp (EUP) + reciprocal.  approx=True vrcp was
    # considered but kept exact to stay safely inside the 2e-5 check tolerance.
    e = jnp.exp(-jnp.abs(zt))
    s = e * pl.reciprocal(1.0 + e)                           # sigmoid(-|z|)
    out_ref[...] = jnp.where(zt >= 0, 1.0 - s, s)


# --------------------------------------------------------------------------- #
# wrapper
# --------------------------------------------------------------------------- #
def _pick_tile_b(batch, input_dim, max_tile_b):
    """VMEM-budgeted batch tile.  Returns (tile_b, nb).

    When the batch is split, tile_b is a multiple of 128 so every (4, tile_b) /
    (out_dim, tile_b) block stays lane-dense; when it is not split the single
    tile covers the exact batch (no padding, no stats mask).
    """
    # Stage 1 dominates VMEM: double-buffered x tile (last dim lane-padded to a
    # 128 multiple) + double-buffered (4, tile_b) output (sublane-padded to 8).
    bytes_per_row = 2 * _round_up(input_dim, 128) * 4 + 2 * 8 * 4
    budget = 24 * 1024 * 1024          # working budget, well under vmem_limit_bytes
    cap = max(128, min(max_tile_b, (budget // bytes_per_row) // 128 * 128))
    if batch >= 256:
        # Keep nb >= 2 so the single "parallel" grid axis feeds both TensorCores
        # on megacore chips (v7x); elsewhere it only costs ~0.35 us/extra step.
        cap = min(cap, _round_up(pl.cdiv(batch, 2), 128))
    if batch <= cap:
        return batch, 1
    return cap, pl.cdiv(batch, cap)


def _fold_bn_scale_shift(partial_stats, batch, gamma, beta, eps=_EPS):
    """(nb, 4, 2) per-tile [sum | sumsq] -> (4, 2) [scale | shift] for h*scale+shift."""
    s = jnp.sum(partial_stats, axis=0)                 # (4, 2) global reduction
    mean = s[:, 0] / batch
    var = s[:, 1] / batch - mean * mean                # biased batch variance (training)
    var = jnp.maximum(var, 0.0)                        # guard E[h^2]-E[h]^2 cancellation
    scale = gamma.reshape(-1) * jax.lax.rsqrt(var + eps)
    shift = beta.reshape(-1) - mean * scale
    return jnp.stack([scale, shift], axis=1).astype(jnp.float32)   # (4, 2)


def vanilla_discriminator(x, params, *, max_tile_b=4096):
    """x: [B, input_dim] float32. Returns [B, output_dim] float32."""
    x = x.astype(jnp.float32)
    B, input_dim = x.shape
    out_dim = params["w3"].shape[1]
    f32 = jnp.float32

    tile_b, nb = _pick_tile_b(B, input_dim, max_tile_b)
    Bp = nb * tile_b
    needs_mask = Bp != B
    if needs_mask:
        x = jnp.pad(x, ((0, Bp - B), (0, 0)))   # zero rows; masked out of BN stats

    cp = pltpu.CompilerParams(
        dimension_semantics=("parallel",),      # safe: BN stats reduced globally
        vmem_limit_bytes=48 * 1024 * 1024,      # fits v7x's 64 MiB physical VMEM
    )
    stats_spec = pl.BlockSpec((pl.Squeezed(), 4, 2), lambda i: (i, 0, 0))
    ht_spec = pl.BlockSpec((4, tile_b), lambda i: (0, i))     # lane-dense (4, B) tiles

    w1t = params["w1"].T.astype(f32)                    # (4, input_dim)
    w2t = params["w2"].T.astype(f32)                    # (4, 4)
    w3t = params["w3"].T.astype(f32)                    # (out_dim, 4)
    b3c = params["b3"].reshape(out_dim, 1).astype(f32)  # (out_dim, 1)

    # ---- stage 1: h1^T = W1^T @ x^T, per-tile BN partial stats ----------------
    h1t, ps1 = pl.pallas_call(
        _stage1_kernel,
        grid=(nb,),
        in_specs=[
            pl.BlockSpec((tile_b, input_dim), lambda i: (i, 0)),
            pl.BlockSpec((4, input_dim), lambda i: (0, 0)),
        ],
        out_specs=[ht_spec, stats_spec],
        out_shape=[
            jax.ShapeDtypeStruct((4, Bp), f32),
            jax.ShapeDtypeStruct((nb, 4, 2), f32),
        ],
        compiler_params=cp,
    )(x, w1t)
    sc1 = _fold_bn_scale_shift(ps1, B, params["g1"], params["be1"])

    # ---- stage 2: BN1+LeakyReLU fold, h2^T = W2^T @ a^T, BN partial stats -----
    h2t, ps2 = pl.pallas_call(
        functools.partial(_stage2_kernel, tile_b=tile_b, batch=B,
                          needs_mask=needs_mask),
        grid=(nb,),
        in_specs=[
            ht_spec,
            pl.BlockSpec((4, 2), lambda i: (0, 0)),
            pl.BlockSpec((4, 4), lambda i: (0, 0)),
        ],
        out_specs=[ht_spec, stats_spec],
        out_shape=[
            jax.ShapeDtypeStruct((4, Bp), f32),
            jax.ShapeDtypeStruct((nb, 4, 2), f32),
        ],
        compiler_params=cp,
    )(h1t, sc1, w2t)
    sc2 = _fold_bn_scale_shift(ps2, B, params["g2"], params["be2"])

    # ---- stage 3: BN2+LeakyReLU fold, Linear3 + Sigmoid, lane-dense output ----
    out_t = pl.pallas_call(
        _stage3_kernel,
        grid=(nb,),
        in_specs=[
            ht_spec,
            pl.BlockSpec((4, 2), lambda i: (0, 0)),
            pl.BlockSpec((out_dim, 4), lambda i: (0, 0)),
            pl.BlockSpec((out_dim, 1), lambda i: (0, 0)),
        ],
        out_specs=pl.BlockSpec((out_dim, tile_b), lambda i: (0, i)),
        out_shape=jax.ShapeDtypeStruct((out_dim, Bp), f32),
        compiler_params=cp,
    )(h2t, sc2, w3t, b3c)

    return out_t[:, :B].T                               # (B, out_dim)


# --------------------------------------------------------------------------- #
# params + pure-JAX reference (PyTorch semantics, biases included)
# --------------------------------------------------------------------------- #
def init_params(key, input_dim, output_dim):
    """Deterministic synthetic init (PyTorch-like uniform fan-in ranges)."""
    ks = jax.random.split(key, 6)

    def lin(kw, kb, fan_in, fan_out):
        bound = 1.0 / jnp.sqrt(jnp.float32(fan_in))
        w = jax.random.uniform(kw, (fan_in, fan_out), jnp.float32, -bound, bound)
        b = jax.random.uniform(kb, (fan_out,), jnp.float32, -bound, bound)
        return w, b

    w1, b1 = lin(ks[0], ks[1], input_dim, 4)
    w2, b2 = lin(ks[2], ks[3], 4, 4)
    w3, b3 = lin(ks[4], ks[5], 4, output_dim)
    return {
        "w1": w1, "b1": b1,
        "g1": jnp.ones((4,), jnp.float32), "be1": jnp.zeros((4,), jnp.float32),
        "w2": w2, "b2": b2,
        "g2": jnp.ones((4,), jnp.float32), "be2": jnp.zeros((4,), jnp.float32),
        "w3": w3, "b3": b3,
    }


def _reference(x, p):
    """Pure-JAX reference of the PyTorch forward (training-mode BatchNorm)."""
    eps = _EPS

    def bn_lrelu(h, g, be):
        mu = jnp.mean(h, axis=0, keepdims=True)
        var = jnp.mean((h - mu) ** 2, axis=0, keepdims=True)
        h = (h - mu) / jnp.sqrt(var + eps) * g + be
        return jnp.where(h > 0, h, _NEG_SLOPE * h)

    h = bn_lrelu(x @ p["w1"] + p["b1"], p["g1"], p["be1"])
    h = bn_lrelu(h @ p["w2"] + p["b2"], p["g2"], p["be2"])
    return jax.nn.sigmoid(h @ p["w3"] + p["b3"])


if __name__ == "__main__":
    key = jax.random.PRNGKey(0)
    k_x, k_x2, k_p = jax.random.split(key, 3)

    input_dim, output_dim = 16, 1
    params = init_params(k_p, input_dim, output_dim)

    # small batch: single full-extent tile, no padding / no mask path
    B = 8
    x = jax.random.normal(k_x, (B, input_dim), jnp.float32)
    out = jax.block_until_ready(vanilla_discriminator(x, params))
    ref = _reference(x, params)
    assert out.shape == (B, output_dim)
    assert jnp.allclose(out, ref, atol=2e-5, rtol=2e-5), float(
        jnp.max(jnp.abs(out - ref)))

    # larger batch: exercises the split (nb>=2), padded + masked-stats path
    B2 = 300
    x2 = jax.random.normal(k_x2, (B2, input_dim), jnp.float32)
    out2 = jax.block_until_ready(vanilla_discriminator(x2, params))
    ref2 = _reference(x2, params)
    assert out2.shape == (B2, output_dim)
    assert jnp.allclose(out2, ref2, atol=2e-5, rtol=2e-5), float(
        jnp.max(jnp.abs(out2 - ref2)))

    print("KERNEL_OK")
</pallas_src>

<mosaic_0001>
module attributes {stable_mosaic.version = 11 : i64} {
  func.func @_stage1_kernel(%arg0: i32, %arg1: memref<8x16xf32, #tpu.memory_space<vmem>>, %arg2: memref<4x16xf32, #tpu.memory_space<vmem>>, %arg3: memref<4x8xf32, #tpu.memory_space<vmem>>, %arg4: memref<1x4x2xf32, #tpu.memory_space<vmem>>) attributes {dimension_semantics = [#tpu.dimension_semantics<parallel>], iteration_bounds = array<i64: 1>, scalar_prefetch = 0 : i64, scratch_operands = 0 : i64, tpu.core_type = #tpu.core_type<tc>, window_params = [{transform_indices = @transform_0, window_bounds = array<i64: 8, 16>}, {pipeline_mode = #tpu.pipeline_mode<synchronous>, transform_indices = @transform_1, window_bounds = array<i64: 4, 16>}, {transform_indices = @transform_2, window_bounds = array<i64: 4, 8>}, {transform_indices = @transform_3, window_bounds = array<i64: 1, 4, 2>}]} {
    %c0 = arith.constant 0 : index
    %c0_0 = arith.constant 0 : index
    %0 = vector.load %arg2[%c0, %c0_0] : memref<4x16xf32, #tpu.memory_space<vmem>>, vector<4x16xf32>
    %c0_1 = arith.constant 0 : index
    %c0_2 = arith.constant 0 : index
    %1 = vector.load %arg1[%c0_1, %c0_2] : memref<8x16xf32, #tpu.memory_space<vmem>>, vector<8x16xf32>
    %cst = arith.constant dense<0.000000e+00> : vector<4x8xf32>
    %2 = tpu.matmul %0, %1, %cst {dimension_numbers = #tpu.dot_dimension_numbers<[1], [1], [0], [0], [0, 0, 1, 0], [], []>} : vector<4x16xf32>, vector<8x16xf32>, vector<4x8xf32> -> vector<4x8xf32>
    %c0_3 = arith.constant 0 : index
    %c0_4 = arith.constant 0 : index
    %3 = vector.load %arg3[%c0_3, %c0_4] : memref<4x8xf32, #tpu.memory_space<vmem>>, vector<4x8xf32>
    tpu.vector_store %arg3[%c0_3, %c0_4], %2 {strides = array<i32>} : memref<4x8xf32, #tpu.memory_space<vmem>>, vector<4x8xf32>,
    %cst_5 = arith.constant dense<0.000000e+00> : vector<4xf32>
    %4 = vector.multi_reduction <add>, %2, %cst_5 [1] : vector<4x8xf32> to vector<4xf32>
    %5 = vector.shape_cast %4 : vector<4xf32> to vector<4x1xf32>
    %c0_6 = arith.constant 0 : index
    %c0_7 = arith.constant 0 : index
    %c0_8 = arith.constant 0 : index
    %6 = vector.load %arg4[%c0_6, %c0_7, %c0_8] : memref<1x4x2xf32, #tpu.memory_space<vmem>>, vector<1x4x1xf32>
    %7 = vector.shape_cast %6 : vector<1x4x1xf32> to vector<4x1xf32>
    %8 = vector.shape_cast %5 : vector<4x1xf32> to vector<1x4x1xf32>
    tpu.vector_store %arg4[%c0_6, %c0_7, %c0_8], %8 {strides = array<i32>} : memref<1x4x2xf32, #tpu.memory_space<vmem>>, vector<1x4x1xf32>,
    %9 = arith.mulf %2, %2 : vector<4x8xf32>
    %cst_9 = arith.constant dense<0.000000e+00> : vector<4xf32>
    %10 = vector.multi_reduction <add>, %9, %cst_9 [1] : vector<4x8xf32> to vector<4xf32>
    %11 = vector.shape_cast %10 : vector<4xf32> to vector<4x1xf32>
    %c0_10 = arith.constant 0 : index
    %c0_11 = arith.constant 0 : index
    %c1 = arith.constant 1 : index
    %12 = vector.load %arg4[%c0_10, %c0_11, %c1] : memref<1x4x2xf32, #tpu.memory_space<vmem>>, vector<1x4x1xf32>
    %13 = vector.shape_cast %12 : vector<1x4x1xf32> to vector<4x1xf32>
    %14 = vector.shape_cast %11 : vector<4x1xf32> to vector<1x4x1xf32>
    tpu.vector_store %arg4[%c0_10, %c0_11, %c1], %14 {strides = array<i32>} : memref<1x4x2xf32, #tpu.memory_space<vmem>>, vector<1x4x1xf32>,
    return
  }
  func.func @transform_0(%arg0: i32) -> (i32, i32) {
    %c0_i32 = arith.constant 0 : i32
    %c0_i32_0 = arith.constant 0 : i32
    return %arg0, %c0_i32 : i32, i32
  }
  func.func @transform_1(%arg0: i32) -> (i32, i32) {
    %c0_i32 = arith.constant 0 : i32
    %c0_i32_0 = arith.constant 0 : i32
    %c0_i32_1 = arith.constant 0 : i32
    return %c0_i32, %c0_i32_0 : i32, i32
  }
  func.func @transform_2(%arg0: i32) -> (i32, i32) {
    %c0_i32 = arith.constant 0 : i32
    %c0_i32_0 = arith.constant 0 : i32
    return %c0_i32, %arg0 : i32, i32
  }
  func.func @transform_3(%arg0: i32) -> (i32, i32, i32) {
    %c0_i32 = arith.constant 0 : i32
    %c0_i32_0 = arith.constant 0 : i32
    %c0_i32_1 = arith.constant 0 : i32
    return %arg0, %c0_i32, %c0_i32_0 : i32, i32, i32
  }
}

</mosaic_0001>

<llo_original>
// kernel: tpu_custom_call.1
$region0: #{tpu_custom_call.1}
  #allocation0 [shape = 'u32[]', space=smem, size = 0x4, offset = 0x4, fixed_abs, tag = 'smem constant byte address 0x4 - core index']
  #allocation1 [shape = 'u32[144,128]{1,0:T(1,128)}', space=vmem, size = 0x12000, scoped, tag = 'internal scratch']
  %s0 = inlined_call_operand.hbm [shape: f32[8,16], index: 0, kind: input, shape index: {}]
  %s1 = inlined_call_operand.hbm [shape: f32[4,16], index: 1, kind: input, shape index: {}]
  %s2 = inlined_call_operand.hbm [shape: f32[4,8], index: 2, kind: output, shape index: {0}]
  %s3 = inlined_call_operand.vmem [shape: f32[1,4,2], index: 3, kind: output, shape index: {1}]
  %4 = xla_tuple %s2, %s3
  %s5 = sld [smem:[#allocation0]]
  $region34: #{tpu_custom_call.1} parent=0
    _
  %s7 = ssub.s32 1, %s5
  %s8 = scalar_select 0, %s7, %s5
  $region1: #{tpu_custom_call.1} parent=0
    #allocation2 [shape = 'u8[4096]{0}', space=vmem, size = 0x1000, scoped, tag = 'input window, operand 0, single buffered']
    #allocation3 [shape = 's32[1]{0}', space=sflag, size = 0x4, scoped, tag = 'scoped memory for tpu_custom_call.1']
    #allocation4 [shape = 's32[1]{0}', space=sflag, size = 0x4, scoped, tag = 'scoped memory for tpu_custom_call.1']
    #allocation5 [shape = 'u8[2048]{0}', space=vmem, size = 0x800, scoped, tag = 'input window, operand 1, single buffered']
    #allocation6 [shape = 's32[1]{0}', space=sflag, size = 0x4, scoped, tag = 'scoped memory for tpu_custom_call.1']
    #allocation7 [shape = 'u8[2048]{0}', space=vmem, size = 0x800, scoped, tag = 'output window, operand 0, single buffered']
    %9 = vsyncpa [#allocation3], 0
    %10 = vsyncpa [#allocation6], 0
    %11 = vsyncpa [#allocation4], 0
    // Predicated region
    $region2: #{tpu_custom_call.1} parent=1 // pred_check
      _
    $region3: #{tpu_custom_call.1} parent=1 // pred_check_branch
      %13 = sbr.rel (0) target = $region5
    $region4: #{tpu_custom_call.1} parent=1 // pred_region
      %s15 = ssub.s32 128, 128
      %16 = vsyncadd [#allocation3], %s15
      %s18 = sshll.u32 [#allocation2], 4
      %s19 = int_to_ptr.vmem [resolvable:$true] %s18
      %21 = dma.hbm_to_vmem [thread:$0]  %s0, 128, %s19, [#allocation3]
    $region5: #{tpu_custom_call.1} parent=1 // pred_fallthru
      _
    // Predicated region
    $region6: #{tpu_custom_call.1} parent=1 // pred_check
      _
    $region7: #{tpu_custom_call.1} parent=1 // pred_check_branch
      %23 = sbr.rel (0) target = $region9
    $region8: #{tpu_custom_call.1} parent=1 // pred_region
      %s25 = ssub.s32 64, 64
      %26 = vsyncadd [#allocation6], %s25
      %s28 = sshll.u32 [#allocation5], 4
      %s29 = int_to_ptr.vmem [resolvable:$true] %s28
      %31 = dma.hbm_to_vmem [thread:$0]  %s1, 64, %s29, [#allocation6]
    $region9: #{tpu_custom_call.1} parent=1 // pred_fallthru
      _
    // Predicated region
    $region10: #{tpu_custom_call.1} parent=1 // pred_check
      _
    $region11: #{tpu_custom_call.1} parent=1 // pred_check_branch
      %33 = sbr.rel (0) target = $region13
    $region12: #{tpu_custom_call.1} parent=1 // pred_region
      %34 = dma.done [#allocation3], 128
    $region13: #{tpu_custom_call.1} parent=1 // pred_fallthru
      _
    // Predicated region
    $region14: #{tpu_custom_call.1} parent=1 // pred_check
      _
    $region15: #{tpu_custom_call.1} parent=1 // pred_check_branch
      %36 = sbr.rel (0) target = $region17
    $region16: #{tpu_custom_call.1} parent=1 // pred_region
      %37 = dma.done [#allocation6], 64
    $region17: #{tpu_custom_call.1} parent=1 // pred_fallthru
      _
    %v38 = vld [vmem:[#allocation5] sm:$0xf]
    %v39 = vld [vmem:[#allocation2] sm:$0xff]
    %vm40 = vcmask 130048
    %v42 = vsel %vm40, %v38, 0
    %v45 = vsel %vm40, %v39, 0
    %47 = vmatprep.subr.mxu0 0.0
    %48 = vmatpush1.xpose.msra.mxu0 0.0
    %49 = vmatprep.subr.mxu0 0.0
    %50 = vmatpush1.xpose.msra.mxu0 0.0
    %51 = vmatprep.subr.mxu0 0.0
    %52 = vmatpush1.xpose.msra.mxu0 0.0
    %53 = vmatprep.subr.mxu0 0.0
    %54 = vmatpush1.xpose.msra.mxu0 0.0
    %55 = vmatprep.subr.mxu0 0.0
    %56 = vmatpush1.xpose.msra.mxu0 0.0
    %57 = vmatprep.subr.mxu0 0.0
    %58 = vmatpush1.xpose.msra.mxu0 0.0
    %59 = vmatprep.subr.mxu0 0.0
    %60 = vmatpush1.xpose.msra.mxu0 0.0
    %61 = vmatprep.subr.mxu0 0.0
    %62 = vmatpush1.xpose.msra.mxu0 0.0
    %63 = vmatprep.subr.mxu0 0.0
    %64 = vmatpush1.xpose.msra.mxu0 0.0
    %65 = vmatprep.subr.mxu0 0.0
    %66 = vmatpush1.xpose.msra.mxu0 0.0
    %67 = vmatprep.subr.mxu0 0.0
    %68 = vmatpush1.xpose.msra.mxu0 0.0
    %69 = vmatprep.subr.mxu0 0.0
    %70 = vmatpush1.xpose.msra.mxu0 0.0
    %71 = vmatprep.subr.mxu0 0.0
    %72 = vmatpush1.xpose.msra.mxu0 0.0
    %73 = vmatprep.subr.mxu0 0.0
    %74 = vmatpush1.xpose.msra.mxu0 0.0
    %75 = vmatprep.subr.mxu0 0.0
    %76 = vmatpush1.xpose.msra.mxu0 0.0
    %77 = vmatprep.subr.mxu0 0.0
    %78 = vmatpush1.xpose.msra.mxu0 %v45
    %79 = vmatprep.subr.mxu0 0.0
    %80 = vmatpush2.xpose.msra.mxu0 0.0
    %81 = vmatprep.subr.mxu0 0.0
    %82 = vmatpush2.xpose.msra.mxu0 0.0
    %83 = vmatprep.subr.mxu0 0.0
    %84 = vmatpush2.xpose.msra.mxu0 0.0
    %85 = vmatprep.subr.mxu0 0.0
    %86 = vmatpush2.xpose.msra.mxu0 0.0
    %87 = vmatprep.subr.mxu0 0.0
    %88 = vmatpush2.xpose.msra.mxu0 0.0
    %89 = vmatprep.subr.mxu0 0.0
    %90 = vmatpush2.xpose.msra.mxu0 0.0
    %91 = vmatprep.subr.mxu0 0.0
    %92 = vmatpush2.xpose.msra.mxu0 0.0
    %93 = vmatprep.subr.mxu0 0.0
    %94 = vmatpush2.xpose.msra.mxu0 0.0
    %95 = vmatprep.subr.mxu0 0.0
    %96 = vmatpush2.xpose.msra.mxu0 0.0
    %97 = vmatprep.subr.mxu0 0.0
    %98 = vmatpush2.xpose.msra.mxu0 0.0
    %99 = vmatprep.subr.mxu0 0.0
    %100 = vmatpush2.xpose.msra.mxu0 0.0
    %101 = vmatprep.subr.mxu0 0.0
    %102 = vmatpush2.xpose.msra.mxu0 0.0
    %103 = vmatprep.subr.mxu0 0.0
    %104 = vmatpush2.xpose.msra.mxu0 0.0
    %105 = vmatprep.subr.mxu0 0.0
    %106 = vmatpush2.xpose.msra.mxu0 0.0
    %107 = vmatprep.subr.mxu0 0.0
    %108 = vmatpush2.xpose.msra.mxu0 0.0
    %109 = vmatprep.subr.mxu0 0.0
    %110 = vmatpush2.xpose.msra.mxu0 0.0
    %111 = vmatprep.mubr.f32.mxu0 0.0
    %112 = vmatmul.mubr.f32.gmra.mxu0 %v42
    %v113 = vpop.f32.mrf.mxu0
    %v114 = vadd.f32 0.0, %v113
    %v115 = vpop.f32.mrf.mxu0
    %116 = vdwg.mxu0
    %vm117 = vcmask 60416
    %118 = vst.msk [vmem:[#allocation7] sm:$0xf] %vm117, %v114
    %v119 = vsel %vm117, %v114, 0.0
    %120 = vadd.xlane.f32.xlu0 %v119
    %v121 = vpop.xlane.xlu0 %120
    %vm122 = vcmask 3072
    %123 = vst.msk [vmem:[%s3] sm:$0xf] %vm122, %v121
    %v124 = vmul.f32 %v114, %v114
    %v125 = vsel %vm117, %v124, 0.0
    %126 = vadd.xlane.f32.xlu0 %v125
    %v127 = vpop.xlane.xlu0 %126
    %vm128 = vcmask 11272
    %129 = vst.msk [vmem:[%s3] sm:$0xf] %vm128, %v127
    // Predicated region
    $region18: #{tpu_custom_call.1} parent=1 // pred_check
      _
    $region19: #{tpu_custom_call.1} parent=1 // pred_check_branch
      %131 = sbr.rel (0) target = $region21
    $region20: #{tpu_custom_call.1} parent=1 // pred_region
      %s133 = ssub.s32 64, 64
      %134 = vsyncadd [#allocation4], %s133
      %s136 = sshll.u32 [#allocation7], 4
      %s137 = int_to_ptr.vmem [resolvable:$true] %s136
      %139 = dma.vmem_to_hbm [thread:$0]  %s137, 64, %s2, [#allocation4]
    $region21: #{tpu_custom_call.1} parent=1 // pred_fallthru
      _
    // Predicated region
    $region22: #{tpu_custom_call.1} parent=1 // pred_check
      _
    $region23: #{tpu_custom_call.1} parent=1 // pred_check_branch
      %141 = sbr.rel (0) target = $region25
    $region24: #{tpu_custom_call.1} parent=1 // pred_region
      _
    $region25: #{tpu_custom_call.1} parent=1 // pred_fallthru
      _
    // Predicated region
    $region26: #{tpu_custom_call.1} parent=1 // pred_check
      _
    $region27: #{tpu_custom_call.1} parent=1 // pred_check_branch
      %143 = sbr.rel (0) target = $region29
    $region28: #{tpu_custom_call.1} parent=1 // pred_region
      %144 = dma.done [#allocation4], 64
    $region29: #{tpu_custom_call.1} parent=1 // pred_fallthru
      _
    // Predicated region
    $region30: #{tpu_custom_call.1} parent=1 // pred_check
      _
    $region31: #{tpu_custom_call.1} parent=1 // pred_check_branch
      %146 = sbr.rel (0) target = $region33
    $region32: #{tpu_custom_call.1} parent=1 // pred_region
      _
    $region33: #{tpu_custom_call.1} parent=1 // pred_fallthru
      _
    %147 = vsyncpa [#allocation3], 1
    %148 = vsyncpa [#allocation6], 1
    %149 = vsyncpa [#allocation4], 1

</llo_original>
